<compile_context>
chip_gen: v7x
topology: tpu7x:2x2x1
jax: 0.10.0
libtpu: 0.0.40
codegen_flags: <defaults>
</compile_context>

<pallas_src>
import jax
import jax.numpy as jnp
from jax.experimental import pallas as pl
from jax.experimental.pallas import tpu as pltpu


def _copy_kernel(x_ref, o_ref):
    # Identity copy of one lane-dense tile (VMEM -> VMEM); HBM DMA in/out is
    # pipelined by the BlockSpec machinery.
    o_ref[...] = x_ref[...]


# Per-block byte budget and explicit scoped-VMEM limit.  Double buffering of
# input + output keeps ~4x one block resident (~24 MiB), which fits the
# 40 MiB limit with headroom on every generation (v7x physical VMEM = 64 MiB).
_TILE_BYTES = 6 * 1024 * 1024
_VMEM_LIMIT_BYTES = 40 * 1024 * 1024


def _round_down(x: int, m: int) -> int:
    return (x // m) * m


def _round_up(x: int, m: int) -> int:
    return ((x + m - 1) // m) * m


def flattern(x: jax.Array) -> jax.Array:
    """Equivalent of PyTorch `x.view(bs, -1)`, copy done in a Pallas kernel."""
    bs = x.shape[0]
    flat = 1
    for d in x.shape[1:]:
        flat *= d
    total = bs * flat
    itemsize = jnp.dtype(x.dtype).itemsize
    # Sublane packing: 8 rows/vreg for 32-bit, 16 for 16-bit, 32 for 8-bit.
    sub = max(8, 32 // itemsize)

    # --- Preferred path: refactor the flat element stream into a fully
    # (sublane, lane)-dense 2-D slab (rows x lane), lane a multiple of 128. ---
    lane = None
    for cand in (2048, 1024, 512, 256, 128):
        if total % cand == 0 and (total // cand) >= sub:
            lane = cand
            break
    if lane is None and total % 128 == 0:
        lane = 128  # rows < sub: full-extent row block still valid.

    if lane is not None:
        rows = total // lane
        budget_rows = max(sub, _round_down(_TILE_BYTES // (lane * itemsize), sub))
        if rows <= budget_rows:
            if rows >= 2 * sub:
                # Whole slab fits one block: still split into ~4 grid steps so
                # "parallel" semantics can shard over v7x's two TensorCores.
                row_tile = _round_up(max(sub, -(-rows // 4)), sub)
            else:
                row_tile = rows  # tiny input: single full-extent block
        else:
            # Near-budget tile (multiple of `sub`); last partial block masked.
            row_tile = budget_rows

        grid = (pl.cdiv(rows, row_tile),)
        x2d = x.reshape(rows, lane)  # free: element order unchanged
        out2d = pl.pallas_call(
            _copy_kernel,
            out_shape=jax.ShapeDtypeStruct((rows, lane), x.dtype),
            grid=grid,
            in_specs=[pl.BlockSpec((row_tile, lane), lambda i: (i, 0))],
            out_specs=pl.BlockSpec((row_tile, lane), lambda i: (i, 0)),
            compiler_params=pltpu.CompilerParams(
                dimension_semantics=("parallel",),
                vmem_limit_bytes=_VMEM_LIMIT_BYTES,
            ),
        )(x2d)
        return out2d.reshape(bs, flat)

    # --- Fallback (total not a multiple of 128): copy the (bs, flat) slab,
    # tiling BOTH axes so the block stays within the byte budget. ---
    x2d = x.reshape(bs, flat)
    if flat >= 128:
        flat_tile = min(_round_down(flat, 128), 8 * 1024)  # multiple of 128
    else:
        flat_tile = flat  # full-extent lane block (< 128)
    max_bs_rows = max(1, _TILE_BYTES // (flat_tile * itemsize))
    if bs <= max_bs_rows:
        bs_tile = bs  # full-extent row block
    else:
        bs_tile = max(sub, _round_down(max_bs_rows, sub))

    out2d = pl.pallas_call(
        _copy_kernel,
        out_shape=jax.ShapeDtypeStruct((bs, flat), x.dtype),
        grid=(pl.cdiv(bs, bs_tile), pl.cdiv(flat, flat_tile)),
        in_specs=[pl.BlockSpec((bs_tile, flat_tile), lambda i, j: (i, j))],
        out_specs=pl.BlockSpec((bs_tile, flat_tile), lambda i, j: (i, j)),
        compiler_params=pltpu.CompilerParams(
            dimension_semantics=("parallel", "parallel"),
            vmem_limit_bytes=_VMEM_LIMIT_BYTES,
        ),
    )(x2d)
    return out2d


if __name__ == "__main__":
    key = jax.random.PRNGKey(0)

    # Primary check: small NCHW conv feature map (preferred lane-dense path).
    x = jax.random.normal(key, (2, 4, 16, 16), dtype=jnp.float32)
    y = jax.block_until_ready(flattern(x))
    ref = x.reshape(x.shape[0], -1)
    assert y.shape == (2, 4 * 16 * 16), y.shape
    assert y.dtype == x.dtype
    assert jnp.array_equal(y, ref)

    # Multi-step grid with a masked partial last block on the preferred path.
    x2 = jax.random.normal(key, (4, 3, 33, 128), dtype=jnp.float32)
    y2 = jax.block_until_ready(flattern(x2))
    assert jnp.array_equal(y2, x2.reshape(4, -1))

    # Fallback path (total element count not a multiple of 128).
    x3 = jax.random.normal(key, (2, 3, 5, 7), dtype=jnp.float32)
    y3 = jax.block_until_ready(flattern(x3))
    assert jnp.array_equal(y3, x3.reshape(2, -1))

    print("KERNEL_OK")
</pallas_src>

<mosaic_0001>
module attributes {stable_mosaic.version = 11 : i64} {
  func.func @_copy_kernel(%arg0: i32, %arg1: memref<8x256xf32, #tpu.memory_space<vmem>>, %arg2: memref<8x256xf32, #tpu.memory_space<vmem>>) attributes {dimension_semantics = [#tpu.dimension_semantics<parallel>], iteration_bounds = array<i64: 1>, scalar_prefetch = 0 : i64, scratch_operands = 0 : i64, tpu.core_type = #tpu.core_type<tc>, window_params = [{transform_indices = @transform_0, window_bounds = array<i64: 8, 256>}, {transform_indices = @transform_1, window_bounds = array<i64: 8, 256>}]} {
    %c0 = arith.constant 0 : index
    %c0_0 = arith.constant 0 : index
    %0 = vector.load %arg1[%c0, %c0_0] : memref<8x256xf32, #tpu.memory_space<vmem>>, vector<8x256xf32>
    %c0_1 = arith.constant 0 : index
    %c0_2 = arith.constant 0 : index
    %1 = vector.load %arg2[%c0_1, %c0_2] : memref<8x256xf32, #tpu.memory_space<vmem>>, vector<8x256xf32>
    tpu.vector_store %arg2[%c0_1, %c0_2], %0 {strides = array<i32>} : memref<8x256xf32, #tpu.memory_space<vmem>>, vector<8x256xf32>,
    return
  }
  func.func @transform_0(%arg0: i32) -> (i32, i32) {
    %c0_i32 = arith.constant 0 : i32
    %c0_i32_0 = arith.constant 0 : i32
    return %arg0, %c0_i32 : i32, i32
  }
  func.func @transform_1(%arg0: i32) -> (i32, i32) {
    %c0_i32 = arith.constant 0 : i32
    %c0_i32_0 = arith.constant 0 : i32
    return %arg0, %c0_i32 : i32, i32
  }
}

</mosaic_0001>

<llo_original>
// kernel: tpu_custom_call.1
$region0: #{tpu_custom_call.1}
  #allocation0 [shape = 'u32[]', space=smem, size = 0x4, offset = 0x4, fixed_abs, tag = 'smem constant byte address 0x4 - core index']
  #allocation1 [shape = 'u32[144,128]{1,0:T(1,128)}', space=vmem, size = 0x12000, scoped, tag = 'internal scratch']
  %s0 = inlined_call_operand.hbm [shape: f32[8,256], index: 0, kind: input, shape index: {}]
  %s1 = inlined_call_operand.hbm [shape: f32[8,256], index: 1, kind: output, shape index: {}]
  %s2 = sld [smem:[#allocation0]]
  $region18: #{tpu_custom_call.1} parent=0
    _
  %s4 = ssub.s32 1, %s2
  %s5 = scalar_select 0, %s4, %s2
  $region1: #{tpu_custom_call.1} parent=0
    #allocation2 [shape = 'u8[8192]{0}', space=vmem, size = 0x2000, scoped, tag = 'input window, operand 0, single buffered']
    #allocation3 [shape = 's32[1]{0}', space=sflag, size = 0x4, scoped, tag = 'scoped memory for tpu_custom_call.1']
    #allocation4 [shape = 's32[1]{0}', space=sflag, size = 0x4, scoped, tag = 'scoped memory for tpu_custom_call.1']
    #allocation5 [shape = 'u8[8192]{0}', space=vmem, size = 0x2000, scoped, tag = 'output window, operand 0, single buffered']
    %6 = vsyncpa [#allocation3], 0
    %7 = vsyncpa [#allocation4], 0
    // Predicated region
    $region2: #{tpu_custom_call.1} parent=1 // pred_check
      _
    $region3: #{tpu_custom_call.1} parent=1 // pred_check_branch
      %9 = sbr.rel (0) target = $region5
    $region4: #{tpu_custom_call.1} parent=1 // pred_region
      %s11 = ssub.s32 256, 256
      %12 = vsyncadd [#allocation3], %s11
      %s14 = sshll.u32 [#allocation2], 4
      %s15 = int_to_ptr.vmem [resolvable:$true] %s14
      %17 = dma.hbm_to_vmem [thread:$0]  %s0, 256, %s15, [#allocation3]
    $region5: #{tpu_custom_call.1} parent=1 // pred_fallthru
      _
    // Predicated region
    $region6: #{tpu_custom_call.1} parent=1 // pred_check
      _
    $region7: #{tpu_custom_call.1} parent=1 // pred_check_branch
      %19 = sbr.rel (0) target = $region9
    $region8: #{tpu_custom_call.1} parent=1 // pred_region
      %20 = dma.done [#allocation3], 256
    $region9: #{tpu_custom_call.1} parent=1 // pred_fallthru
      _
    %v21 = vld [vmem:[#allocation2] sm:$0xff]
    %v22 = vld [vmem:[#allocation2 + $0x8] sm:$0xff]
    %23 = vst [vmem:[#allocation5] sm:$0xff] %v21
    %24 = vst [vmem:[#allocation5 + $0x8] sm:$0xff] %v22
    // Predicated region
    $region10: #{tpu_custom_call.1} parent=1 // pred_check
      _
    $region11: #{tpu_custom_call.1} parent=1 // pred_check_branch
      %26 = sbr.rel (0) target = $region13
    $region12: #{tpu_custom_call.1} parent=1 // pred_region
      %s28 = ssub.s32 256, 256
      %29 = vsyncadd [#allocation4], %s28
      %s31 = sshll.u32 [#allocation5], 4
      %s32 = int_to_ptr.vmem [resolvable:$true] %s31
      %34 = dma.vmem_to_hbm [thread:$0]  %s32, 256, %s1, [#allocation4]
    $region13: #{tpu_custom_call.1} parent=1 // pred_fallthru
      _
    // Predicated region
    $region14: #{tpu_custom_call.1} parent=1 // pred_check
      _
    $region15: #{tpu_custom_call.1} parent=1 // pred_check_branch
      %36 = sbr.rel (0) target = $region17
    $region16: #{tpu_custom_call.1} parent=1 // pred_region
      %37 = dma.done [#allocation4], 256
    $region17: #{tpu_custom_call.1} parent=1 // pred_fallthru
      _
    %38 = vsyncpa [#allocation3], 1
    %39 = vsyncpa [#allocation4], 1

</llo_original>
